<compile_context>
chip_gen: v7x
topology: tpu7x:2x2x1
jax: 0.10.0
libtpu: 0.0.40
codegen_flags: <defaults>
</compile_context>

<pallas_src>
import jax
import jax.numpy as jnp
from jax.experimental import pallas as pl
from jax.experimental.pallas import tpu as pltpu

_LANES = 128                       # vreg lane width: last dim of the lane-dense view
_TARGET_TILE_BYTES = 2 * 1024 * 1024  # ~2 MiB per grid step -> ~85% of HBM roofline


def _render_kernel(x_ref, o_ref):
    """Base rendering component forward: identity pass-through.

    Concrete subclasses replace this body with their rendering math.
    Guidance for real compute dropped in here:
      * matmuls: jnp.dot(..., preferred_element_type=jnp.float32) with
        128-multiple contraction/output dims.
      * exp / recip / rsqrt: pl.reciprocal(..., approx=True) / jnp.exp ride the
        EUP slot (free vs. VALU/MXU); cross-lane shuffles via pltpu.roll (XLU).
      * reductions: keep the reduction axis as the last ("arbitrary") grid axis,
        accumulate in an f32 VMEM scratch with pl.when init/finalize.
      * v7x: VMEM is 64 MiB (not 128) - re-derive tiling when adding weight /
        K/V operands (sum of all operands x buffer_count must fit); MXU has no
        integer path (bf16/fp8 only), so int8 weights need a dequant step.
      * v5e: only 1 vector-store slot and no bf16 VPU/EUP - upcast bf16
        elementwise math to f32 or keep it on the MXU.
    """
    o_ref[...] = x_ref[...]


def _sublane_min(dtype) -> int:
    """Minimum second-to-last block dim for this dtype (packing-aware)."""
    return {4: 8, 2: 16, 1: 32}.get(jnp.dtype(dtype).itemsize, 8)


def _pick_tile_rows(rows: int, dtype) -> int:
    """Rows per grid step for a (rows, 128) lane-dense view.

    * ~2 MiB per block (amortizes the ~0.35 us per-step overhead).
    * If everything fits one block, split into >= 2 blocks so the ("parallel",)
      grid axis can be sharded across v7x's two TensorCores.
    * Always a multiple of the dtype sublane minimum (or the full extent for
      arrays smaller than one sublane group).
    """
    sub = _sublane_min(dtype)
    itemsize = jnp.dtype(dtype).itemsize
    if rows <= sub:
        return rows  # single full-extent block (valid below the sublane minimum)
    target = max(sub, (_TARGET_TILE_BYTES // (_LANES * itemsize)) // sub * sub)
    if rows <= target:
        half = -(-rows // 2)                      # ceil(rows / 2)
        return min(rows, -(-half // sub) * sub)   # round up to sublane multiple
    return target


@jax.jit
def base_rendering_component_forward(x: jax.Array) -> jax.Array:
    """Pallas-backed forward template for BaseRenderingComponent (identity)."""
    n = x.size
    dtype = x.dtype
    itemsize = jnp.dtype(dtype).itemsize

    if n % _LANES == 0:
        # Lane-dense 2D view; for contiguous input this reshape is free (a view),
        # so no extra HBM traffic outside the kernel.
        rows = n // _LANES
        flat2d = x.reshape(rows, _LANES)
        pad = 0
    else:
        # TODO(synk): ragged tails could be masked in-kernel (scalar-prefetch n +
        # pltpu.store mask) to avoid this extra pad/slice HBM pass; the abstract
        # base class only needs the correctness fallback here.
        rows = pl.cdiv(n, _LANES)
        pad = rows * _LANES - n
        flat2d = jnp.pad(x.reshape(-1), (0, pad)).reshape(rows, _LANES)

    tile_rows = _pick_tile_rows(rows, dtype)
    grid = (pl.cdiv(rows, tile_rows),)

    y2d = pl.pallas_call(
        _render_kernel,
        out_shape=jax.ShapeDtypeStruct((rows, _LANES), dtype),
        grid=grid,
        in_specs=[pl.BlockSpec((tile_rows, _LANES), lambda i: (i, 0))],
        out_specs=pl.BlockSpec((tile_rows, _LANES), lambda i: (i, 0)),
        # NOTE: no input_output_aliases - the input is a non-donated jit argument,
        # so XLA would insert a defensive copy and the alias buys nothing; callers
        # that can donate should alias at their own jit boundary.
        compiler_params=pltpu.CompilerParams(
            dimension_semantics=("parallel",),
            # (in + out) x 2 double-buffers x ~2 MiB tile ~= 8 MiB live; 32 MiB
            # leaves headroom and stays within v5e/v6e (128 MiB) and v7x (64 MiB).
            vmem_limit_bytes=32 * 1024 * 1024,
        ),
        # Bandwidth-only op: let the XLA scheduler overlap it with neighbors.
        cost_estimate=pl.CostEstimate(
            flops=0,
            transcendentals=0,
            bytes_accessed=2 * rows * _LANES * itemsize,
        ),
    )(flat2d)

    if pad:
        return y2d.reshape(-1)[:n].reshape(x.shape)
    return y2d.reshape(x.shape)


class BaseRenderingComponentJAX:
    """Mirror of the PyTorch class: no parameters, abstract-style forward."""

    # Subclasses that install real rendering math flip this (or override
    # forward) so the Pallas template actually runs; the pure base-class
    # forward is an identity and is short-circuited to avoid a full HBM
    # read+write pass for zero compute.
    _HAS_RENDER_COMPUTE = False

    @classmethod
    def get(cls, *args) -> "BaseRenderingComponentJAX":
        # TODO(synk): torch.nn.DataParallel multi-GPU wrapping has no
        # single-kernel equivalent; multi-device execution is handled by JAX
        # sharding outside the kernel (the "parallel" grid axis already lets
        # v7x's two TensorCores split the per-chip work).
        return cls(*args)

    def forward(self, x: jax.Array) -> jax.Array:
        # TODO(synk): forward() is @abstractmethod in the source module; only
        # the base-class identity semantics exist here.
        if not self._HAS_RENDER_COMPUTE:
            return x
        return base_rendering_component_forward(x)

    __call__ = forward


if __name__ == "__main__":
    key = jax.random.PRNGKey(0)
    # Small NCHW rendering-feature tensor: batch=2, channels=4, spatial=16x16.
    x = jax.random.normal(key, (2, 4, 16, 16), dtype=jnp.float32)

    # Base-class path: identity short-circuit (no kernel launch).
    component = BaseRenderingComponentJAX.get()
    y_base = jax.block_until_ready(component(x))

    # Exercise the Pallas template (the path subclasses build on).
    y_kernel = jax.block_until_ready(base_rendering_component_forward(x))

    assert y_kernel.shape == x.shape and y_kernel.dtype == x.dtype
    assert bool(jnp.allclose(y_kernel, x))
    assert bool(jnp.allclose(y_base, x))
    print("KERNEL_OK")
</pallas_src>

<mosaic_0001>
module attributes {stable_mosaic.version = 11 : i64} {
  func.func @_render_kernel(%arg0: i32, %arg1: memref<8x128xf32, #tpu.memory_space<vmem>>, %arg2: memref<8x128xf32, #tpu.memory_space<vmem>>) attributes {dimension_semantics = [#tpu.dimension_semantics<parallel>], iteration_bounds = array<i64: 2>, scalar_prefetch = 0 : i64, scratch_operands = 0 : i64, tpu.core_type = #tpu.core_type<tc>, window_params = [{transform_indices = @transform_0, window_bounds = array<i64: 8, 128>}, {transform_indices = @transform_1, window_bounds = array<i64: 8, 128>}]} {
    %c0 = arith.constant 0 : index
    %c0_0 = arith.constant 0 : index
    %0 = vector.load %arg1[%c0, %c0_0] : memref<8x128xf32, #tpu.memory_space<vmem>>, vector<8x128xf32>
    %c0_1 = arith.constant 0 : index
    %c0_2 = arith.constant 0 : index
    %1 = vector.load %arg2[%c0_1, %c0_2] : memref<8x128xf32, #tpu.memory_space<vmem>>, vector<8x128xf32>
    tpu.vector_store %arg2[%c0_1, %c0_2], %0 {strides = array<i32>} : memref<8x128xf32, #tpu.memory_space<vmem>>, vector<8x128xf32>,
    return
  }
  func.func @transform_0(%arg0: i32) -> (i32, i32) {
    %c0_i32 = arith.constant 0 : i32
    %c0_i32_0 = arith.constant 0 : i32
    return %arg0, %c0_i32 : i32, i32
  }
  func.func @transform_1(%arg0: i32) -> (i32, i32) {
    %c0_i32 = arith.constant 0 : i32
    %c0_i32_0 = arith.constant 0 : i32
    return %arg0, %c0_i32 : i32, i32
  }
}

</mosaic_0001>

<llo_original>
// kernel: base_rendering_component_forward.1
$region0: #{base_rendering_component_forward.1}
  #allocation0 [shape = 'u32[]', space=smem, size = 0x4, offset = 0x4, fixed_abs, tag = 'smem constant byte address 0x4 - core index']
  #allocation1 [shape = 'u32[144,128]{1,0:T(1,128)}', space=vmem, size = 0x12000, scoped, tag = 'internal scratch']
  %s0 = inlined_call_operand.vmem [shape: f32[16,128], index: 0, kind: input, shape index: {}]
  %s1 = inlined_call_operand.vmem [shape: f32[16,128], index: 1, kind: output, shape index: {}]
  %s2 = sld [smem:[#allocation0]]
  $region37: #{base_rendering_component_forward.1} parent=0
    _
  %s4 = ssub.s32 1, %s2
  %s5 = scalar_select 0, %s4, %s2
  loop: start=0, step=1, limit=4
  $region2: #{base_rendering_component_forward.1} parent=0 // loop_pre_header
    _
  $region3: #{base_rendering_component_forward.1} parent=0 // loop_header
    %s7 = sphi 0, %s11
    %p8 = scmp.ge.s32.totalorder %s7, 4
    %s17 = sphi 0, %s19
    %s20 = sphi 0, %s17
    %s21 = sphi 0, %s20
    %s37 = sphi 0, %s21
    %s43 = sphi 0, %s45
    %s46 = sphi 0, %s43
    %s47 = sphi 0, %s46
    %s63 = sphi 0, %s47
  $region4: #{base_rendering_component_forward.1} parent=0 // loop_header_branch
    %10 = sbr.rel (%p8) target = $region8
  $region5: #{base_rendering_component_forward.1} parent=0 // loop_body
    %s12 = ssub.s32 %s7, 1
    %s13 = ssub.s32 %s7, 2
    %s14 = sadd.s32 %s7, 1
    %s15 = ssub.s32 %s7, %s14
    %p16 = scmp.eq.s32.totalorder %s15, 0
    %s18 = sadd.s32 %s17, 1
    %s19 = scalar_select %p16, %s17, %s18
    %p22 = pneg %p16
    %p23 = scmp.eq.s32.totalorder %s7, 1
    %p24 = por %p22, %p23
    %p25 = scmp.ne.s32.totalorder %s17, %s20
    %p26 = scmp.eq.s32.totalorder %s7, 0
    %p27 = por %p25, %p26
    %p28 = scmp.ne.s32.totalorder %s17, %s20
    %p29 = scmp.eq.s32.totalorder %s12, 1
    %p30 = por %p28, %p29
    %p31 = scmp.ne.s32.totalorder %s20, %s21
    %p32 = scmp.eq.s32.totalorder %s12, 0
    %p33 = por %p31, %p32
    %p34 = scmp.ne.s32.totalorder %s20, %s21
    %p35 = scmp.eq.s32.totalorder %s13, 1
    %p36 = por %p34, %p35
    %p38 = scmp.ne.s32.totalorder %s21, %s37
    %p39 = scmp.eq.s32.totalorder %s13, 0
    %p40 = por %p38, %p39
    %s41 = ssub.s32 %s7, %s14
    %p42 = scmp.eq.s32.totalorder %s41, 0
    %s44 = sadd.s32 %s43, 1
    %s45 = scalar_select %p42, %s43, %s44
    %p48 = pneg %p42
    %p49 = scmp.eq.s32.totalorder %s7, 1
    %p50 = por %p48, %p49
    %p51 = scmp.ne.s32.totalorder %s43, %s46
    %p52 = scmp.eq.s32.totalorder %s7, 0
    %p53 = por %p51, %p52
    %p54 = scmp.ne.s32.totalorder %s43, %s46
    %p55 = scmp.eq.s32.totalorder %s12, 1
    %p56 = por %p54, %p55
    %p57 = scmp.ne.s32.totalorder %s46, %s47
    %p58 = scmp.eq.s32.totalorder %s12, 0
    %p59 = por %p57, %p58
    %p60 = scmp.ne.s32.totalorder %s46, %s47
    %p61 = scmp.eq.s32.totalorder %s13, 1
    %p62 = por %p60, %p61
    %p64 = scmp.ne.s32.totalorder %s47, %s63
    %p65 = scmp.eq.s32.totalorder %s13, 0
    %p66 = por %p64, %p65
    %p67 = scmp.le.s32.totalorder 1, %s7
    %p68 = scmp.lt.s32.totalorder %s7, 3
    %p69 = pnand %p67, %p68
    %p70 = pneg %p69
    // Predicated region
    $region9: #{base_rendering_component_forward.1} parent=5 // pred_check
      _
    $region10: #{base_rendering_component_forward.1} parent=5 // pred_check_branch
      %72 = sbr.rel (%p69) target = $region12
    $region11: #{base_rendering_component_forward.1} parent=5 // pred_region
      %s73 = ssub.s32 %s7, 1
    $region12: #{base_rendering_component_forward.1} parent=5 // pred_fallthru
      _
    %p74 = scmp.lt.s32.totalorder %s7, 2
    // Predicated region
    $region13: #{base_rendering_component_forward.1} parent=5 // pred_check
      %p75 = pneg %p74
    $region14: #{base_rendering_component_forward.1} parent=5 // pred_check_branch
      %77 = sbr.rel (%p75) target = $region16
    $region15: #{base_rendering_component_forward.1} parent=5 // pred_region
      // Predicated region
      $region17: #{base_rendering_component_forward.1} parent=15 // pred_check
        %p78 = pneg %p27
      $region18: #{base_rendering_component_forward.1} parent=15 // pred_check_branch
        %80 = sbr.rel (%p78) target = $region20
      $region19: #{base_rendering_component_forward.1} parent=15 // pred_region
        %p81 = scmp.lt.s32.totalorder %s7, 1
        %s82 = scalar_select %p81, %s7, 1
        %s83 = smul.addr %s82, 8
        %s84 = scalar_lea.vmem %s0, %s83
      $region20: #{base_rendering_component_forward.1} parent=15 // pred_fallthru
        _
    $region16: #{base_rendering_component_forward.1} parent=5 // pred_fallthru
      _
    %p85 = scmp.le.s32.totalorder 1, %s7
    %p86 = scmp.lt.s32.totalorder %s7, 3
    %p87 = pnand %p85, %p86
    %p88 = pneg %p87
    // Predicated region
    $region21: #{base_rendering_component_forward.1} parent=5 // pred_check
      _
    $region22: #{base_rendering_component_forward.1} parent=5 // pred_check_branch
      %90 = sbr.rel (%p87) target = $region24
    $region23: #{base_rendering_component_forward.1} parent=5 // pred_region
      %s91 = ssub.s32 %s7, 1
      %p92 = scmp.lt.s32.totalorder %s12, 1
      %s93 = scalar_select %p92, %s12, 1
      %s94 = smul.addr %s93, 8
      %s95 = scalar_lea.vmem %s0, %s94
      %p96 = pneg %p33
      %p97 = pneg %p30
      %p98 = pneg %p59
      %p99 = pneg %p56
      %p100 = scmp.lt.s32.totalorder %s12, 1
      %s101 = scalar_select %p100, %s12, 1
      %s102 = smul.addr %s101, 8
      %s103 = scalar_lea.vmem %s1, %s102
      %p104 = scmp.lt.s32.totalorder %s12, 1
      %s105 = scalar_select %p104, %s12, 1
      %s106 = smul.addr %s105, 8
      %s107 = scalar_lea.vmem %s0, %s106
      %p108 = scmp.lt.s32.totalorder %s12, 1
      %s109 = scalar_select %p108, %s12, 1
      %s110 = smul.addr %s109, 8
      %s111 = scalar_lea.vmem %s1, %s110
      %v112 = vld [vmem:[%s107] sm:$0xff]
      %113 = vst [vmem:[%s111] sm:$0xff] %v112
      %p114 = scmp.lt.s32.totalorder %s12, 1
      %s115 = scalar_select %p114, %s12, 1
      %s116 = smul.addr %s115, 8
      %s117 = scalar_lea.vmem %s1, %s116
      // Predicated region
      $region25: #{base_rendering_component_forward.1} parent=23 // pred_check
        %p118 = pneg %p56
      $region26: #{base_rendering_component_forward.1} parent=23 // pred_check_branch
        %120 = sbr.rel (%p118) target = $region28
      $region27: #{base_rendering_component_forward.1} parent=23 // pred_region
        _
      $region28: #{base_rendering_component_forward.1} parent=23 // pred_fallthru
        _
    $region24: #{base_rendering_component_forward.1} parent=5 // pred_fallthru
      _
    %p121 = scmp.le.s32.totalorder 2, %s7
    // Predicated region
    $region29: #{base_rendering_component_forward.1} parent=5 // pred_check
      %p122 = pneg %p121
    $region30: #{base_rendering_component_forward.1} parent=5 // pred_check_branch
      %124 = sbr.rel (%p122) target = $region32
    $region31: #{base_rendering_component_forward.1} parent=5 // pred_region
      %s125 = ssub.s32 %s7, 2
      // Predicated region
      $region33: #{base_rendering_component_forward.1} parent=31 // pred_check
        %p126 = pneg %p62
      $region34: #{base_rendering_component_forward.1} parent=31 // pred_check_branch
        %128 = sbr.rel (%p126) target = $region36
      $region35: #{base_rendering_component_forward.1} parent=31 // pred_region
        %p129 = scmp.lt.s32.totalorder %s13, 1
        %s130 = scalar_select %p129, %s13, 1
        %s131 = smul.addr %s130, 8
        %s132 = scalar_lea.vmem %s1, %s131
      $region36: #{base_rendering_component_forward.1} parent=31 // pred_fallthru
        _
    $region32: #{base_rendering_component_forward.1} parent=5 // pred_fallthru
      _
  $region6: #{base_rendering_component_forward.1} parent=0 // loop_footer
    %s11 = sadd.s32 1, %s7
  $region7: #{base_rendering_component_forward.1} parent=0 // loop_footer_branch
    %6 = sbr.rel target = $region3
  $region8: #{base_rendering_component_forward.1} parent=0 // loop_exit
    _

</llo_original>
